<compile_context>
chip_gen: v7x
topology: tpu7x:2x2x1
jax: 0.10.0
libtpu: 0.0.40
codegen_flags: <defaults>
</compile_context>

<pallas_src>
import jax
import jax.numpy as jnp
from jax.experimental import pallas as pl
from jax.experimental.pallas import tpu as pltpu

_LANE = 128
_SUBLANE = 8


def _round_up(v, m):
    return (v + m - 1) // m * m


def mlp_kernel(x_ref,
               w1_ref, b1_ref,
               w2_ref, b2_ref,
               w3_ref, b3_ref,
               w4_ref, b4_ref,
               w5_ref, b5_ref,
               o_ref):
    """5-layer MLP forward (hidden1..4 + ReLU, predict) on one batch tile."""

    def layer(h, w_ref, b_ref, relu):
        # Matmul inputs in the weight dtype (f32 or bf16), f32 accumulation.
        # Bias add + ReLU epilogue always in f32.
        y = jnp.dot(h.astype(w_ref.dtype), w_ref[...],
                    preferred_element_type=jnp.float32) + b_ref[...]
        return jnp.maximum(y, 0.0) if relu else y

    h = x_ref[...].astype(jnp.float32)
    h = layer(h, w1_ref, b1_ref, True)
    h = layer(h, w2_ref, b2_ref, True)
    h = layer(h, w3_ref, b3_ref, True)
    h = layer(h, w4_ref, b4_ref, True)
    y = layer(h, w5_ref, b5_ref, False)
    o_ref[...] = y.astype(o_ref.dtype)


def net_forward(x, params, *, tile_b=128, compute_dtype=jnp.float32):
    """params = [(w1,b1), ..., (w5,b5)], w_i: (in, out), b_i: (out,)."""
    batch, n_feature = x.shape
    n_hidden = params[0][0].shape[1]
    n_output = params[-1][0].shape[1]

    # Lane-dense padded dims (multiples of 128).
    f_p = _round_up(n_feature, _LANE)
    h_p = _round_up(n_hidden, _LANE)
    o_p = _round_up(n_output, _LANE)

    # Batch tile: multiple of 8 sublanes, no larger than the (padded) batch.
    tile_b = min(tile_b, _round_up(batch, _SUBLANE))
    tile_b = _round_up(tile_b, _SUBLANE)
    batch_p = _round_up(batch, tile_b)

    # Zero-pad input (padded features contribute nothing since padded weight
    # rows/cols and biases are zero).
    x_pad = jnp.zeros((batch_p, f_p), jnp.float32).at[:batch, :n_feature].set(x)

    in_dims = [f_p, h_p, h_p, h_p, h_p]
    out_dims = [h_p, h_p, h_p, h_p, o_p]

    flat = []
    in_specs = [pl.BlockSpec((tile_b, f_p), lambda i: (i, 0))]
    for (w, b), di, do in zip(params, in_dims, out_dims):
        w_pad = jnp.zeros((di, do), compute_dtype).at[
            :w.shape[0], :w.shape[1]].set(w.astype(compute_dtype))
        b_pad = jnp.zeros((1, do), jnp.float32).at[0, :b.shape[0]].set(b)
        flat += [w_pad, b_pad]
        # Constant index_map -> weights/biases stay resident across grid steps.
        in_specs += [pl.BlockSpec((di, do), lambda i: (0, 0)),
                     pl.BlockSpec((1, do), lambda i: (0, 0))]

    grid = (batch_p // tile_b,)

    # VMEM budget (matters on v7x's 64 MiB VMEM): resident padded weights and
    # biases + double-buffered x/out tiles + f32 activation headroom. Only
    # override the default scoped limit if we actually need more.
    resident = sum(int(a.size) * a.dtype.itemsize for a in flat)
    streamed = 2 * 4 * tile_b * (f_p + o_p)     # double-buffered in/out tiles
    act = 4 * 4 * tile_b * h_p                  # in-kernel f32 activations
    need = resident + streamed + act + (4 << 20)
    vmem_limit = need if need > (32 << 20) else None

    out_pad = pl.pallas_call(
        mlp_kernel,
        out_shape=jax.ShapeDtypeStruct((batch_p, o_p), jnp.float32),
        grid=grid,
        in_specs=in_specs,
        out_specs=pl.BlockSpec((tile_b, o_p), lambda i: (i, 0)),
        compiler_params=pltpu.CompilerParams(
            dimension_semantics=("parallel",),
            vmem_limit_bytes=vmem_limit),
    )(x_pad, *flat)

    return out_pad[:batch, :n_output]


def init_params(key, n_feature, n_hidden, n_output):
    """Deterministic init mimicking PyTorch Linear default (uniform +-1/sqrt(fan_in))."""
    dims = [(n_feature, n_hidden),
            (n_hidden, n_hidden),
            (n_hidden, n_hidden),
            (n_hidden, n_hidden),
            (n_hidden, n_output)]
    params = []
    for (fan_in, fan_out) in dims:
        key, kw, kb = jax.random.split(key, 3)
        bound = 1.0 / (fan_in ** 0.5)
        w = jax.random.uniform(kw, (fan_in, fan_out), jnp.float32, -bound, bound)
        b = jax.random.uniform(kb, (fan_out,), jnp.float32, -bound, bound)
        params.append((w, b))
    return params


def reference_forward(x, params):
    h = x
    for i, (w, b) in enumerate(params):
        h = h @ w + b
        if i < len(params) - 1:
            h = jnp.maximum(h, 0.0)
    return h


if __name__ == "__main__":
    n_feature, n_hidden, n_output = 16, 32, 4
    batch = 8

    key = jax.random.PRNGKey(0)
    key, kx = jax.random.split(key)
    x = jax.random.normal(kx, (batch, n_feature), jnp.float32)

    params = init_params(key, n_feature, n_hidden, n_output)
    ref = reference_forward(x, params)

    # f32 MXU path: tight tolerance (matches original module semantics).
    out_f32 = jax.block_until_ready(net_forward(x, params,
                                                compute_dtype=jnp.float32))
    assert out_f32.shape == (batch, n_output)
    assert jnp.allclose(out_f32, ref, atol=1e-5, rtol=1e-5)

    # bf16-in / f32-accumulate MXU path: native MXU dtype, looser tolerance.
    out_bf16 = jax.block_until_ready(net_forward(x, params,
                                                 compute_dtype=jnp.bfloat16))
    assert out_bf16.shape == (batch, n_output)
    assert jnp.allclose(out_bf16, ref, atol=5e-2, rtol=5e-2)

    print("KERNEL_OK")
</pallas_src>

<mosaic_0001>
module attributes {stable_mosaic.version = 11 : i64} {
  func.func @mlp_kernel(%arg0: i32, %arg1: memref<8x128xf32, #tpu.memory_space<vmem>>, %arg2: memref<128x128xf32, #tpu.memory_space<vmem>>, %arg3: memref<1x128xf32, #tpu.memory_space<vmem>>, %arg4: memref<128x128xf32, #tpu.memory_space<vmem>>, %arg5: memref<1x128xf32, #tpu.memory_space<vmem>>, %arg6: memref<128x128xf32, #tpu.memory_space<vmem>>, %arg7: memref<1x128xf32, #tpu.memory_space<vmem>>, %arg8: memref<128x128xf32, #tpu.memory_space<vmem>>, %arg9: memref<1x128xf32, #tpu.memory_space<vmem>>, %arg10: memref<128x128xf32, #tpu.memory_space<vmem>>, %arg11: memref<1x128xf32, #tpu.memory_space<vmem>>, %arg12: memref<8x128xf32, #tpu.memory_space<vmem>>) attributes {dimension_semantics = [#tpu.dimension_semantics<parallel>], iteration_bounds = array<i64: 1>, scalar_prefetch = 0 : i64, scratch_operands = 0 : i64, tpu.core_type = #tpu.core_type<tc>, window_params = [{transform_indices = @transform_0, window_bounds = array<i64: 8, 128>}, {pipeline_mode = #tpu.pipeline_mode<synchronous>, transform_indices = @transform_1, window_bounds = array<i64: 128, 128>}, {pipeline_mode = #tpu.pipeline_mode<synchronous>, transform_indices = @transform_2, window_bounds = array<i64: 1, 128>}, {pipeline_mode = #tpu.pipeline_mode<synchronous>, transform_indices = @transform_3, window_bounds = array<i64: 128, 128>}, {pipeline_mode = #tpu.pipeline_mode<synchronous>, transform_indices = @transform_4, window_bounds = array<i64: 1, 128>}, {pipeline_mode = #tpu.pipeline_mode<synchronous>, transform_indices = @transform_5, window_bounds = array<i64: 128, 128>}, {pipeline_mode = #tpu.pipeline_mode<synchronous>, transform_indices = @transform_6, window_bounds = array<i64: 1, 128>}, {pipeline_mode = #tpu.pipeline_mode<synchronous>, transform_indices = @transform_7, window_bounds = array<i64: 128, 128>}, {pipeline_mode = #tpu.pipeline_mode<synchronous>, transform_indices = @transform_8, window_bounds = array<i64: 1, 128>}, {pipeline_mode = #tpu.pipeline_mode<synchronous>, transform_indices = @transform_9, window_bounds = array<i64: 128, 128>}, {pipeline_mode = #tpu.pipeline_mode<synchronous>, transform_indices = @transform_10, window_bounds = array<i64: 1, 128>}, {transform_indices = @transform_11, window_bounds = array<i64: 8, 128>}]} {
    %c0 = arith.constant 0 : index
    %c0_0 = arith.constant 0 : index
    %0 = vector.load %arg1[%c0, %c0_0] : memref<8x128xf32, #tpu.memory_space<vmem>>, vector<8x128xf32>
    %c0_1 = arith.constant 0 : index
    %c0_2 = arith.constant 0 : index
    %1 = vector.load %arg2[%c0_1, %c0_2] : memref<128x128xf32, #tpu.memory_space<vmem>>, vector<128x128xf32>
    %cst = arith.constant dense<0.000000e+00> : vector<8x128xf32>
    %2 = tpu.matmul %0, %1, %cst {dimension_numbers = #tpu.dot_dimension_numbers<[1], [0], [0], [1], [0, 0, 1, 1], [], []>} : vector<8x128xf32>, vector<128x128xf32>, vector<8x128xf32> -> vector<8x128xf32>
    %c0_3 = arith.constant 0 : index
    %c0_4 = arith.constant 0 : index
    %3 = vector.load %arg3[%c0_3, %c0_4] : memref<1x128xf32, #tpu.memory_space<vmem>>, vector<1x128xf32>
    %4 = vector.broadcast %3 : vector<1x128xf32> to vector<8x128xf32>
    %5 = arith.addf %2, %4 : vector<8x128xf32>
    %cst_5 = arith.constant 0.000000e+00 : f32
    %6 = vector.broadcast %cst_5 : f32 to vector<8x128xf32>
    %7 = arith.maximumf %5, %6 : vector<8x128xf32>
    %c0_6 = arith.constant 0 : index
    %c0_7 = arith.constant 0 : index
    %8 = vector.load %arg4[%c0_6, %c0_7] : memref<128x128xf32, #tpu.memory_space<vmem>>, vector<128x128xf32>
    %cst_8 = arith.constant dense<0.000000e+00> : vector<8x128xf32>
    %9 = tpu.matmul %7, %8, %cst_8 {dimension_numbers = #tpu.dot_dimension_numbers<[1], [0], [0], [1], [0, 0, 1, 1], [], []>} : vector<8x128xf32>, vector<128x128xf32>, vector<8x128xf32> -> vector<8x128xf32>
    %c0_9 = arith.constant 0 : index
    %c0_10 = arith.constant 0 : index
    %10 = vector.load %arg5[%c0_9, %c0_10] : memref<1x128xf32, #tpu.memory_space<vmem>>, vector<1x128xf32>
    %11 = vector.broadcast %10 : vector<1x128xf32> to vector<8x128xf32>
    %12 = arith.addf %9, %11 : vector<8x128xf32>
    %cst_11 = arith.constant 0.000000e+00 : f32
    %13 = vector.broadcast %cst_11 : f32 to vector<8x128xf32>
    %14 = arith.maximumf %12, %13 : vector<8x128xf32>
    %c0_12 = arith.constant 0 : index
    %c0_13 = arith.constant 0 : index
    %15 = vector.load %arg6[%c0_12, %c0_13] : memref<128x128xf32, #tpu.memory_space<vmem>>, vector<128x128xf32>
    %cst_14 = arith.constant dense<0.000000e+00> : vector<8x128xf32>
    %16 = tpu.matmul %14, %15, %cst_14 {dimension_numbers = #tpu.dot_dimension_numbers<[1], [0], [0], [1], [0, 0, 1, 1], [], []>} : vector<8x128xf32>, vector<128x128xf32>, vector<8x128xf32> -> vector<8x128xf32>
    %c0_15 = arith.constant 0 : index
    %c0_16 = arith.constant 0 : index
    %17 = vector.load %arg7[%c0_15, %c0_16] : memref<1x128xf32, #tpu.memory_space<vmem>>, vector<1x128xf32>
    %18 = vector.broadcast %17 : vector<1x128xf32> to vector<8x128xf32>
    %19 = arith.addf %16, %18 : vector<8x128xf32>
    %cst_17 = arith.constant 0.000000e+00 : f32
    %20 = vector.broadcast %cst_17 : f32 to vector<8x128xf32>
    %21 = arith.maximumf %19, %20 : vector<8x128xf32>
    %c0_18 = arith.constant 0 : index
    %c0_19 = arith.constant 0 : index
    %22 = vector.load %arg8[%c0_18, %c0_19] : memref<128x128xf32, #tpu.memory_space<vmem>>, vector<128x128xf32>
    %cst_20 = arith.constant dense<0.000000e+00> : vector<8x128xf32>
    %23 = tpu.matmul %21, %22, %cst_20 {dimension_numbers = #tpu.dot_dimension_numbers<[1], [0], [0], [1], [0, 0, 1, 1], [], []>} : vector<8x128xf32>, vector<128x128xf32>, vector<8x128xf32> -> vector<8x128xf32>
    %c0_21 = arith.constant 0 : index
    %c0_22 = arith.constant 0 : index
    %24 = vector.load %arg9[%c0_21, %c0_22] : memref<1x128xf32, #tpu.memory_space<vmem>>, vector<1x128xf32>
    %25 = vector.broadcast %24 : vector<1x128xf32> to vector<8x128xf32>
    %26 = arith.addf %23, %25 : vector<8x128xf32>
    %cst_23 = arith.constant 0.000000e+00 : f32
    %27 = vector.broadcast %cst_23 : f32 to vector<8x128xf32>
    %28 = arith.maximumf %26, %27 : vector<8x128xf32>
    %c0_24 = arith.constant 0 : index
    %c0_25 = arith.constant 0 : index
    %29 = vector.load %arg10[%c0_24, %c0_25] : memref<128x128xf32, #tpu.memory_space<vmem>>, vector<128x128xf32>
    %cst_26 = arith.constant dense<0.000000e+00> : vector<8x128xf32>
    %30 = tpu.matmul %28, %29, %cst_26 {dimension_numbers = #tpu.dot_dimension_numbers<[1], [0], [0], [1], [0, 0, 1, 1], [], []>} : vector<8x128xf32>, vector<128x128xf32>, vector<8x128xf32> -> vector<8x128xf32>
    %c0_27 = arith.constant 0 : index
    %c0_28 = arith.constant 0 : index
    %31 = vector.load %arg11[%c0_27, %c0_28] : memref<1x128xf32, #tpu.memory_space<vmem>>, vector<1x128xf32>
    %32 = vector.broadcast %31 : vector<1x128xf32> to vector<8x128xf32>
    %33 = arith.addf %30, %32 : vector<8x128xf32>
    %c0_29 = arith.constant 0 : index
    %c0_30 = arith.constant 0 : index
    %34 = vector.load %arg12[%c0_29, %c0_30] : memref<8x128xf32, #tpu.memory_space<vmem>>, vector<8x128xf32>
    tpu.vector_store %arg12[%c0_29, %c0_30], %33 {strides = array<i32>} : memref<8x128xf32, #tpu.memory_space<vmem>>, vector<8x128xf32>,
    return
  }
  func.func @transform_0(%arg0: i32) -> (i32, i32) {
    %c0_i32 = arith.constant 0 : i32
    %c0_i32_0 = arith.constant 0 : i32
    return %arg0, %c0_i32 : i32, i32
  }
  func.func @transform_1(%arg0: i32) -> (i32, i32) {
    %c0_i32 = arith.constant 0 : i32
    %c0_i32_0 = arith.constant 0 : i32
    %c0_i32_1 = arith.constant 0 : i32
    return %c0_i32, %c0_i32_0 : i32, i32
  }
  func.func @transform_2(%arg0: i32) -> (i32, i32) {
    %c0_i32 = arith.constant 0 : i32
    %c0_i32_0 = arith.constant 0 : i32
    %c0_i32_1 = arith.constant 0 : i32
    return %c0_i32, %c0_i32_0 : i32, i32
  }
  func.func @transform_3(%arg0: i32) -> (i32, i32) {
    %c0_i32 = arith.constant 0 : i32
    %c0_i32_0 = arith.constant 0 : i32
    %c0_i32_1 = arith.constant 0 : i32
    return %c0_i32, %c0_i32_0 : i32, i32
  }
  func.func @transform_4(%arg0: i32) -> (i32, i32) {
    %c0_i32 = arith.constant 0 : i32
    %c0_i32_0 = arith.constant 0 : i32
    %c0_i32_1 = arith.constant 0 : i32
    return %c0_i32, %c0_i32_0 : i32, i32
  }
  func.func @transform_5(%arg0: i32) -> (i32, i32) {
    %c0_i32 = arith.constant 0 : i32
    %c0_i32_0 = arith.constant 0 : i32
    %c0_i32_1 = arith.constant 0 : i32
    return %c0_i32, %c0_i32_0 : i32, i32
  }
  func.func @transform_6(%arg0: i32) -> (i32, i32) {
    %c0_i32 = arith.constant 0 : i32
    %c0_i32_0 = arith.constant 0 : i32
    %c0_i32_1 = arith.constant 0 : i32
    return %c0_i32, %c0_i32_0 : i32, i32
  }
  func.func @transform_7(%arg0: i32) -> (i32, i32) {
    %c0_i32 = arith.constant 0 : i32
    %c0_i32_0 = arith.constant 0 : i32
    %c0_i32_1 = arith.constant 0 : i32
    return %c0_i32, %c0_i32_0 : i32, i32
  }
  func.func @transform_8(%arg0: i32) -> (i32, i32) {
    %c0_i32 = arith.constant 0 : i32
    %c0_i32_0 = arith.constant 0 : i32
    %c0_i32_1 = arith.constant 0 : i32
    return %c0_i32, %c0_i32_0 : i32, i32
  }
  func.func @transform_9(%arg0: i32) -> (i32, i32) {
    %c0_i32 = arith.constant 0 : i32
    %c0_i32_0 = arith.constant 0 : i32
    %c0_i32_1 = arith.constant 0 : i32
    return %c0_i32, %c0_i32_0 : i32, i32
  }
  func.func @transform_10(%arg0: i32) -> (i32, i32) {
    %c0_i32 = arith.constant 0 : i32
    %c0_i32_0 = arith.constant 0 : i32
    %c0_i32_1 = arith.constant 0 : i32
    return %c0_i32, %c0_i32_0 : i32, i32
  }
  func.func @transform_11(%arg0: i32) -> (i32, i32) {
    %c0_i32 = arith.constant 0 : i32
    %c0_i32_0 = arith.constant 0 : i32
    return %arg0, %c0_i32 : i32, i32
  }
}

</mosaic_0001>

<llo_original>
// kernel: tpu_custom_call.1
$region0: #{tpu_custom_call.1}
  #allocation0 [shape = 'u32[]', space=smem, size = 0x4, offset = 0x4, fixed_abs, tag = 'smem constant byte address 0x4 - core index']
  #allocation1 [shape = 'u32[144,128]{1,0:T(1,128)}', space=vmem, size = 0x12000, scoped, tag = 'internal scratch']
  %s0 = inlined_call_operand.hbm [shape: f32[8,128], index: 0, kind: input, shape index: {}]
  %s1 = inlined_call_operand.hbm [shape: f32[128,128], index: 1, kind: input, shape index: {}]
  %s2 = inlined_call_operand.vmem [shape: f32[1,128], index: 2, kind: input, shape index: {}]
  %s3 = inlined_call_operand.hbm [shape: f32[128,128], index: 3, kind: input, shape index: {}]
  %s4 = inlined_call_operand.vmem [shape: f32[1,128], index: 4, kind: input, shape index: {}]
  %s5 = inlined_call_operand.hbm [shape: f32[128,128], index: 5, kind: input, shape index: {}]
  %s6 = inlined_call_operand.vmem [shape: f32[1,128], index: 6, kind: input, shape index: {}]
  %s7 = inlined_call_operand.hbm [shape: f32[128,128], index: 7, kind: input, shape index: {}]
  %s8 = inlined_call_operand.vmem [shape: f32[1,128], index: 8, kind: input, shape index: {}]
  %s9 = inlined_call_operand.hbm [shape: f32[128,128], index: 9, kind: input, shape index: {}]
  %s10 = inlined_call_operand.vmem [shape: f32[1,128], index: 10, kind: input, shape index: {}]
  %s11 = inlined_call_operand.hbm [shape: f32[8,128], index: 11, kind: output, shape index: {}]
  %s12 = sld [smem:[#allocation0]]
  $region78: #{tpu_custom_call.1} parent=0
    _
  %s14 = ssub.s32 1, %s12
  %s15 = scalar_select 0, %s14, %s12
  $region1: #{tpu_custom_call.1} parent=0
    #allocation2 [shape = 'u8[4096]{0}', space=vmem, size = 0x1000, scoped, tag = 'input window, operand 0, single buffered']
    #allocation3 [shape = 's32[1]{0}', space=sflag, size = 0x4, scoped, tag = 'scoped memory for tpu_custom_call.1']
    #allocation4 [shape = 's32[1]{0}', space=sflag, size = 0x4, scoped, tag = 'scoped memory for tpu_custom_call.1']
    #allocation5 [shape = 'u8[65536]{0}', space=vmem, size = 0x10000, scoped, tag = 'input window, operand 1, single buffered']
    #allocation6 [shape = 's32[1]{0}', space=sflag, size = 0x4, scoped, tag = 'scoped memory for tpu_custom_call.1']
    #allocation7 [shape = 'u8[65536]{0}', space=vmem, size = 0x10000, scoped, tag = 'input window, operand 3, single buffered']
    #allocation8 [shape = 'u8[65536]{0}', space=vmem, size = 0x10000, scoped, tag = 'input window, operand 5, single buffered']
    #allocation9 [shape = 's32[1]{0}', space=sflag, size = 0x4, scoped, tag = 'scoped memory for tpu_custom_call.1']
    #allocation10 [shape = 'u8[65536]{0}', space=vmem, size = 0x10000, scoped, tag = 'input window, operand 7, single buffered']
    #allocation11 [shape = 'u8[65536]{0}', space=vmem, size = 0x10000, scoped, tag = 'input window, operand 9, single buffered']
    #allocation12 [shape = 's32[1]{0}', space=sflag, size = 0x4, scoped, tag = 'scoped memory for tpu_custom_call.1']
    #allocation13 [shape = 'u8[4096]{0}', space=vmem, size = 0x1000, scoped, tag = 'output window, operand 0, single buffered']
    %16 = vsyncpa [#allocation3], 0
    %17 = vsyncpa [#allocation6], 0
    %18 = vsyncpa [#allocation9], 0
    %19 = vsyncpa [#allocation12], 0
    %20 = vsyncpa [#allocation4], 0
    // Predicated region
    $region2: #{tpu_custom_call.1} parent=1 // pred_check
      _
    $region3: #{tpu_custom_call.1} parent=1 // pred_check_branch
      %22 = sbr.rel (0) target = $region5
    $region4: #{tpu_custom_call.1} parent=1 // pred_region
      %s24 = ssub.s32 128, 128
      %25 = vsyncadd [#allocation3], %s24
      %s27 = sshll.u32 [#allocation2], 4
      %s28 = int_to_ptr.vmem [resolvable:$true] %s27
      %30 = dma.hbm_to_vmem [thread:$0]  %s0, 128, %s28, [#allocation3]
    $region5: #{tpu_custom_call.1} parent=1 // pred_fallthru
      _
    // Predicated region
    $region6: #{tpu_custom_call.1} parent=1 // pred_check
      _
    $region7: #{tpu_custom_call.1} parent=1 // pred_check_branch
      %32 = sbr.rel (0) target = $region9
    $region8: #{tpu_custom_call.1} parent=1 // pred_region
      %s34 = ssub.s32 2048, 2048
      %35 = vsyncadd [#allocation6], %s34
      %s36 = sshll.u32 [#allocation5], 4
      %s37 = int_to_ptr.vmem [resolvable:$true] %s36
      %42 = dma.hbm_to_vmem [thread:$0]  %s1, 2048, %s37, [#allocation6], 128, 128, 8
    $region9: #{tpu_custom_call.1} parent=1 // pred_fallthru
      _
    // Predicated region
    $region10: #{tpu_custom_call.1} parent=1 // pred_check
      _
    $region11: #{tpu_custom_call.1} parent=1 // pred_check_branch
      %44 = sbr.rel (0) target = $region13
    $region12: #{tpu_custom_call.1} parent=1 // pred_region
      _
    $region13: #{tpu_custom_call.1} parent=1 // pred_fallthru
      _
    // Predicated region
    $region14: #{tpu_custom_call.1} parent=1 // pred_check
      _
    $region15: #{tpu_custom_call.1} parent=1 // pred_check_branch
      %46 = sbr.rel (0) target = $region17
    $region16: #{tpu_custom_call.1} parent=1 // pred_region
      %s48 = ssub.s32 2048, 2048
      %49 = vsyncadd [#allocation6], %s48
      %s50 = sshll.u32 [#allocation7], 4
      %s51 = int_to_ptr.vmem [resolvable:$true] %s50
      %56 = dma.hbm_to_vmem [thread:$0]  %s3, 2048, %s51, [#allocation6], 128, 128, 8
    $region17: #{tpu_custom_call.1} parent=1 // pred_fallthru
      _
    // Predicated region
    $region18: #{tpu_custom_call.1} parent=1 // pred_check
      _
    $region19: #{tpu_custom_call.1} parent=1 // pred_check_branch
      %58 = sbr.rel (0) target = $region21
    $region20: #{tpu_custom_call.1} parent=1 // pred_region
      _
    $region21: #{tpu_custom_call.1} parent=1 // pred_fallthru
      _
    // Predicated region
    $region22: #{tpu_custom_call.1} parent=1 // pred_check
      _
    $region23: #{tpu_custom_call.1} parent=1 // pred_check_branch
      %60 = sbr.rel (0) target = $region25
    $region24: #{tpu_custom_call.1} parent=1 // pred_region
      %s62 = ssub.s32 2048, 2048
      %63 = vsyncadd [#allocation9], %s62
      %s64 = sshll.u32 [#allocation8], 4
      %s65 = int_to_ptr.vmem [resolvable:$true] %s64
      %70 = dma.hbm_to_vmem [thread:$0]  %s5, 2048, %s65, [#allocation9], 128, 128, 8
    $region25: #{tpu_custom_call.1} parent=1 // pred_fallthru
      _
    // Predicated region
    $region26: #{tpu_custom_call.1} parent=1 // pred_check
      _
    $region27: #{tpu_custom_call.1} parent=1 // pred_check_branch
      %72 = sbr.rel (0) target = $region29
    $region28: #{tpu_custom_call.1} parent=1 // pred_region
      _
    $region29: #{tpu_custom_call.1} parent=1 // pred_fallthru
      _
    // Predicated region
    $region30: #{tpu_custom_call.1} parent=1 // pred_check
      _
    $region31: #{tpu_custom_call.1} parent=1 // pred_check_branch
      %74 = sbr.rel (0) target = $region33
    $region32: #{tpu_custom_call.1} parent=1 // pred_region
      %s76 = ssub.s32 2048, 2048
      %77 = vsyncadd [#allocation9], %s76
      %s78 = sshll.u32 [#allocation10], 4
      %s79 = int_to_ptr.vmem [resolvable:$true] %s78
      %84 = dma.hbm_to_vmem [thread:$0]  %s7, 2048, %s79, [#allocation9], 128, 128, 8
    $region33: #{tpu_custom_call.1} parent=1 // pred_fallthru
      _
    // Predicated region
    $region34: #{tpu_custom_call.1} parent=1 // pred_check
      _
    $region35: #{tpu_custom_call.1} parent=1 // pred_check_branch
      %86 = sbr.rel (0) target = $region37
    $region36: #{tpu_custom_call.1} parent=1 // pred_region
      _
    $region37: #{tpu_custom_call.1} parent=1 // pred_fallthru
      _
    // Predicated region
    $region38: #{tpu_custom_call.1} parent=1 // pred_check
      _
    $region39: #{tpu_custom_call.1} parent=1 // pred_check_branch
      %88 = sbr.rel (0) target = $region41
    $region40: #{tpu_custom_call.1} parent=1 // pred_region
      %s90 = ssub.s32 2048, 2048
      %91 = vsyncadd [#allocation12], %s90
      %s92 = sshll.u32 [#allocation11], 4
      %s93 = int_to_ptr.vmem [resolvable:$true] %s92
      %98 = dma.hbm_to_vmem [thread:$0]  %s9, 2048, %s93, [#allocation12], 128, 128, 8
    $region41: #{tpu_custom_call.1} parent=1 // pred_fallthru
      _
    // Predicated region
    $region42: #{tpu_custom_call.1} parent=1 // pred_check
      _
    $region43: #{tpu_custom_call.1} parent=1 // pred_check_branch
      %100 = sbr.rel (0) target = $region45
    $region44: #{tpu_custom_call.1} parent=1 // pred_region
      _
    $region45: #{tpu_custom_call.1} parent=1 // pred_fallthru
      _
    // Predicated region
    $region46: #{tpu_custom_call.1} parent=1 // pred_check
      _
    $region47: #{tpu_custom_call.1} parent=1 // pred_check_branch
      %102 = sbr.rel (0) target = $region49
    $region48: #{tpu_custom_call.1} parent=1 // pred_region
      %103 = dma.done [#allocation3], 128
    $region49: #{tpu_custom_call.1} parent=1 // pred_fallthru
      _
    // Predicated region
    $region50: #{tpu_custom_call.1} parent=1 // pred_check
      _
    $region51: #{tpu_custom_call.1} parent=1 // pred_check_branch
      %105 = sbr.rel (0) target = $region53
    $region52: #{tpu_custom_call.1} parent=1 // pred_region
      %106 = dma.done [#allocation6], 2048
    $region53: #{tpu_custom_call.1} parent=1 // pred_fallthru
      _
    // Predicated region
    $region54: #{tpu_custom_call.1} parent=1 // pred_check
      _
    $region55: #{tpu_custom_call.1} parent=1 // pred_check_branch
      %108 = sbr.rel (0) target = $region57
    $region56: #{tpu_custom_call.1} parent=1 // pred_region
      %109 = dma.done [#allocation6], 2048
    $region57: #{tpu_custom_call.1} parent=1 // pred_fallthru
      _
    // Predicated region
    $region58: #{tpu_custom_call.1} parent=1 // pred_check
      _
    $region59: #{tpu_custom_call.1} parent=1 // pred_check_branch
      %111 = sbr.rel (0) target = $region61
    $region60: #{tpu_custom_call.1} parent=1 // pred_region
      %112 = dma.done [#allocation9], 2048
    $region61: #{tpu_custom_call.1} parent=1 // pred_fallthru
      _
    // Predicated region
    $region62: #{tpu_custom_call.1} parent=1 // pred_check
      _
    $region63: #{tpu_custom_call.1} parent=1 // pred_check_branch
      %114 = sbr.rel (0) target = $region65
    $region64: #{tpu_custom_call.1} parent=1 // pred_region
      %115 = dma.done [#allocation9], 2048
    $region65: #{tpu_custom_call.1} parent=1 // pred_fallthru
      _
    // Predicated region
    $region66: #{tpu_custom_call.1} parent=1 // pred_check
      _
    $region67: #{tpu_custom_call.1} parent=1 // pred_check_branch
      %117 = sbr.rel (0) target = $region69
    $region68: #{tpu_custom_call.1} parent=1 // pred_region
      %118 = dma.done [#allocation12], 2048
    $region69: #{tpu_custom_call.1} parent=1 // pred_fallthru
      _
    %v119 = vld [vmem:[#allocation2] sm:$0xff]
    %v120 = vld [vmem:[#allocation5] sm:$0xff]
    %v121 = vld [vmem:[#allocation5 + $0x8] sm:$0xff]
    %v122 = vld [vmem:[#allocation5 + $0x10] sm:$0xff]
    %v123 = vld [vmem:[#allocation5 + $0x18] sm:$0xff]
    %v124 = vld [vmem:[#allocation5 + $0x20] sm:$0xff]
    %v125 = vld [vmem:[#allocation5 + $0x28] sm:$0xff]
    %v126 = vld [vmem:[#allocation5 + $0x30] sm:$0xff]
    %v127 = vld [vmem:[#allocation5 + $0x38] sm:$0xff]
    %v128 = vld [vmem:[#allocation5 + $0x40] sm:$0xff]
    %v129 = vld [vmem:[#allocation5 + $0x48] sm:$0xff]
    %v130 = vld [vmem:[#allocation5 + $0x50] sm:$0xff]
    %v131 = vld [vmem:[#allocation5 + $0x58] sm:$0xff]
    %v132 = vld [vmem:[#allocation5 + $0x60] sm:$0xff]
    %v133 = vld [vmem:[#allocation5 + $0x68] sm:$0xff]
    %v134 = vld [vmem:[#allocation5 + $0x70] sm:$0xff]
    %v135 = vld [vmem:[#allocation5 + $0x78] sm:$0xff]
    %v136 = vld [vmem:[%s2] sm:$0x1]
    %v138 = vlaneseq
    %v139 = vshrl.u32 %v138, 7
    %v140 = vsub.s32 0, %v139
    %v141 = vrot.slane %v136, %v140
    %143 = vmatprep.subr.mxu0 0.0
    %144 = vmatpush1.msra.mxu0 %v120
    %145 = vmatprep.subr.mxu0 0.0
    %146 = vmatpush1.msra.mxu0 %v121
    %147 = vmatprep.subr.mxu0 0.0
    %148 = vmatpush1.msra.mxu0 %v122
    %149 = vmatprep.subr.mxu0 0.0
    %150 = vmatpush1.msra.mxu0 %v123
    %151 = vmatprep.subr.mxu0 0.0
    %152 = vmatpush1.msra.mxu0 %v124
    %153 = vmatprep.subr.mxu0 0.0
    %154 = vmatpush1.msra.mxu0 %v125
    %155 = vmatprep.subr.mxu0 0.0
    %156 = vmatpush1.msra.mxu0 %v126
    %157 = vmatprep.subr.mxu0 0.0
    %158 = vmatpush1.msra.mxu0 %v127
    %159 = vmatprep.subr.mxu0 0.0
    %160 = vmatpush1.msra.mxu0 %v128
    %161 = vmatprep.subr.mxu0 0.0
    %162 = vmatpush1.msra.mxu0 %v129
    %163 = vmatprep.subr.mxu0 0.0
    %164 = vmatpush1.msra.mxu0 %v130
    %165 = vmatprep.subr.mxu0 0.0
    %166 = vmatpush1.msra.mxu0 %v131
    %167 = vmatprep.subr.mxu0 0.0
    %168 = vmatpush1.msra.mxu0 %v132
    %169 = vmatprep.subr.mxu0 0.0
    %170 = vmatpush1.msra.mxu0 %v133
    %171 = vmatprep.subr.mxu0 0.0
    %172 = vmatpush1.msra.mxu0 %v134
    %173 = vmatprep.subr.mxu0 0.0
    %174 = vmatpush1.msra.mxu0 %v135
    %175 = vmatprep.subr.mxu0 0.0
    %176 = vmatpush1.msra.mxu0 0.0
    %177 = vmatprep.subr.mxu0 0.0
    %178 = vmatpush1.msra.mxu0 0.0
    %179 = vmatprep.subr.mxu0 0.0
    %180 = vmatpush1.msra.mxu0 0.0
    %181 = vmatprep.subr.mxu0 0.0
    %182 = vmatpush1.msra.mxu0 0.0
    %183 = vmatprep.subr.mxu0 0.0
    %184 = vmatpush1.msra.mxu0 0.0
    %185 = vmatprep.subr.mxu0 0.0
    %186 = vmatpush1.msra.mxu0 0.0
    %187 = vmatprep.subr.mxu0 0.0
    %188 = vmatpush1.msra.mxu0 0.0
    %189 = vmatprep.subr.mxu0 0.0
    %190 = vmatpush1.msra.mxu0 0.0
    %191 = vmatprep.subr.mxu0 0.0
    %192 = vmatpush1.msra.mxu0 0.0
    %193 = vmatprep.subr.mxu0 0.0
    %194 = vmatpush1.msra.mxu0 0.0
    %195 = vmatprep.subr.mxu0 0.0
    %196 = vmatpush1.msra.mxu0 0.0
    %197 = vmatprep.subr.mxu0 0.0
    %198 = vmatpush1.msra.mxu0 0.0
    %199 = vmatprep.subr.mxu0 0.0
    %200 = vmatpush1.msra.mxu0 0.0
    %201 = vmatprep.subr.mxu0 0.0
    %202 = vmatpush1.msra.mxu0 0.0
    %203 = vmatprep.subr.mxu0 0.0
    %204 = vmatpush1.msra.mxu0 0.0
    %205 = vmatprep.subr.mxu0 0.0
    %206 = vmatpush1.msra.mxu0 0.0
    %207 = vmatprep.mubr.f32.mxu0 0.0
    %208 = vmatmul.mubr.f32.gmra.mrb[0].mxu0 %v119
    %v209 = vpop.f32.mrb[0].mxu0
    %v210 = vadd.f32 %v141, %v209
    %v211 = vpop.f32.mrb[0].mxu0
    %212 = vdwg.mxu0
    %v213 = vmax.f32 %v210, 0.0
    %v214 = vld [vmem:[#allocation7] sm:$0xff]
    %v215 = vld [vmem:[#allocation7 + $0x8] sm:$0xff]
    %v216 = vld [vmem:[#allocation7 + $0x10] sm:$0xff]
    %v217 = vld [vmem:[#allocation7 + $0x18] sm:$0xff]
    %v218 = vld [vmem:[#allocation7 + $0x20] sm:$0xff]
    %v219 = vld [vmem:[#allocation7 + $0x28] sm:$0xff]
    %v220 = vld [vmem:[#allocation7 + $0x30] sm:$0xff]
    %v221 = vld [vmem:[#allocation7 + $0x38] sm:$0xff]
    %v222 = vld [vmem:[#allocation7 + $0x40] sm:$0xff]
    %v223 = vld [vmem:[#allocation7 + $0x48] sm:$0xff]
    %v224 = vld [vmem:[#allocation7 + $0x50] sm:$0xff]
    %v225 = vld [vmem:[#allocation7 + $0x58] sm:$0xff]
    %v226 = vld [vmem:[#allocation7 + $0x60] sm:$0xff]
    %v227 = vld [vmem:[#allocation7 + $0x68] sm:$0xff]
    %v228 = vld [vmem:[#allocation7 + $0x70] sm:$0xff]
    %v229 = vld [vmem:[#allocation7 + $0x78] sm:$0xff]
    %v230 = vld [vmem:[%s4] sm:$0x1]
    %v232 = vlaneseq
    %v233 = vshrl.u32 %v232, 7
    %v234 = vsub.s32 0, %v233
    %v235 = vrot.slane %v230, %v234
    %237 = vmatprep.subr.mxu0 0.0
    %238 = vmatpush1.msra.mxu0 %v214
    %239 = vmatprep.subr.mxu0 0.0
    %240 = vmatpush1.msra.mxu0 %v215
    %241 = vmatprep.subr.mxu0 0.0
    %242 = vmatpush1.msra.mxu0 %v216
    %243 = vmatprep.subr.mxu0 0.0
    %244 = vmatpush1.msra.mxu0 %v217
    %245 = vmatprep.subr.mxu0 0.0
    %246 = vmatpush1.msra.mxu0 %v218
    %247 = vmatprep.subr.mxu0 0.0
    %248 = vmatpush1.msra.mxu0 %v219
    %249 = vmatprep.subr.mxu0 0.0
    %250 = vmatpush1.msra.mxu0 %v220
    %251 = vmatprep.subr.mxu0 0.0
    %252 = vmatpush1.msra.mxu0 %v221
    %253 = vmatprep.subr.mxu0 0.0
    %254 = vmatpush1.msra.mxu0 %v222
    %255 = vmatprep.subr.mxu0 0.0
    %256 = vmatpush1.msra.mxu0 %v223
    %257 = vmatprep.subr.mxu0 0.0
    %258 = vmatpush1.msra.mxu0 %v224
    %259 = vmatprep.subr.mxu0 0.0
    %260 = vmatpush1.msra.mxu0 %v225
    %261 = vmatprep.subr.mxu0 0.0
    %262 = vmatpush1.msra.mxu0 %v226
    %263 = vmatprep.subr.mxu0 0.0
    %264 = vmatpush1.msra.mxu0 %v227
    %265 = vmatprep.subr.mxu0 0.0
    %266 = vmatpush1.msra.mxu0 %v228
    %267 = vmatprep.subr.mxu0 0.0
    %268 = vmatpush1.msra.mxu0 %v229
    %269 = vmatprep.subr.mxu0 0.0
    %270 = vmatpush1.msra.mxu0 0.0
    %271 = vmatprep.subr.mxu0 0.0
    %272 = vmatpush1.msra.mxu0 0.0
    %273 = vmatprep.subr.mxu0 0.0
    %274 = vmatpush1.msra.mxu0 0.0
    %275 = vmatprep.subr.mxu0 0.0
    %276 = vmatpush1.msra.mxu0 0.0
    %277 = vmatprep.subr.mxu0 0.0
    %278 = vmatpush1.msra.mxu0 0.0
    %279 = vmatprep.subr.mxu0 0.0
    %280 = vmatpush1.msra.mxu0 0.0
    %281 = vmatprep.subr.mxu0 0.0
    %282 = vmatpush1.msra.mxu0 0.0
    %283 = vmatprep.subr.mxu0 0.0
    %284 = vmatpush1.msra.mxu0 0.0
    %285 = vmatprep.subr.mxu0 0.0
    %286 = vmatpush1.msra.mxu0 0.0
    %287 = vmatprep.subr.mxu0 0.0
    %288 = vmatpush1.msra.mxu0 0.0
    %289 = vmatprep.subr.mxu0 0.0
    %290 = vmatpush1.msra.mxu0 0.0
    %291 = vmatprep.subr.mxu0 0.0
    %292 = vmatpush1.msra.mxu0 0.0
    %293 = vmatprep.subr.mxu0 0.0
    %294 = vmatpush1.msra.mxu0 0.0
    %295 = vmatprep.subr.mxu0 0.0
    %296 = vmatpush1.msra.mxu0 0.0
    %297 = vmatprep.subr.mxu0 0.0
    %298 = vmatpush1.msra.mxu0 0.0
    %299 = vmatprep.subr.mxu0 0.0
    %300 = vmatpush1.msra.mxu0 0.0
    %301 = vmatprep.mubr.f32.mxu0 0.0
    %302 = vmatmul.mubr.f32.gmra.mrb[0].mxu0 %v213
    %v303 = vpop.f32.mrb[0].mxu0
    %v304 = vadd.f32 %v235, %v303
    %v305 = vpop.f32.mrb[0].mxu0
    %306 = vdwg.mxu0
    %v307 = vmax.f32 %v304, 0.0
    %v308 = vld [vmem:[#allocation8] sm:$0xff]
    %v309 = vld [vmem:[#allocation8 + $0x8] sm:$0xff]
    %v310 = vld [vmem:[#allocation8 + $0x10] sm:$0xff]
    %v311 = vld [vmem:[#allocation8 + $0x18] sm:$0xff]
    %v312 = vld [vmem:[#allocation8 + $0x20] sm:$0xff]
    %v313 = vld [vmem:[#allocation8 + $0x28] sm:$0xff]
    %v314 = vld [vmem:[#allocation8 + $0x30] sm:$0xff]
    %v315 = vld [vmem:[#allocation8 + $0x38] sm:$0xff]
    %v316 = vld [vmem:[#allocation8 + $0x40] sm:$0xff]
    %v317 = vld [vmem:[#allocation8 + $0x48] sm:$0xff]
    %v318 = vld [vmem:[#allocation8 + $0x50] sm:$0xff]
    %v319 = vld [vmem:[#allocation8 + $0x58] sm:$0xff]
    %v320 = vld [vmem:[#allocation8 + $0x60] sm:$0xff]
    %v321 = vld [vmem:[#allocation8 + $0x68] sm:$0xff]
    %v322 = vld [vmem:[#allocation8 + $0x70] sm:$0xff]
    %v323 = vld [vmem:[#allocation8 + $0x78] sm:$0xff]
    %v324 = vld [vmem:[%s6] sm:$0x1]
    %v326 = vlaneseq
    %v327 = vshrl.u32 %v326, 7
    %v328 = vsub.s32 0, %v327
    %v329 = vrot.slane %v324, %v328
    %331 = vmatprep.subr.mxu0 0.0
    %332 = vmatpush1.msra.mxu0 %v308
    %333 = vmatprep.subr.mxu0 0.0
    %334 = vmatpush1.msra.mxu0 %v309
    %335 = vmatprep.subr.mxu0 0.0
    %336 = vmatpush1.msra.mxu0 %v310
    %337 = vmatprep.subr.mxu0 0.0
    %338 = vmatpush1.msra.mxu0 %v311
    %339 = vmatprep.subr.mxu0 0.0
    %340 = vmatpush1.msra.mxu0 %v312
    %341 = vmatprep.subr.mxu0 0.0
    %342 = vmatpush1.msra.mxu0 %v313
    %343 = vmatprep.subr.mxu0 0.0
    %344 = vmatpush1.msra.mxu0 %v314
    %345 = vmatprep.subr.mxu0 0.0
    %346 = vmatpush1.msra.mxu0 %v315
    %347 = vmatprep.subr.mxu0 0.0
    %348 = vmatpush1.msra.mxu0 %v316
    %349 = vmatprep.subr.mxu0 0.0
    %350 = vmatpush1.msra.mxu0 %v317
    %351 = vmatprep.subr.mxu0 0.0
    %352 = vmatpush1.msra.mxu0 %v318
    %353 = vmatprep.subr.mxu0 0.0
    %354 = vmatpush1.msra.mxu0 %v319
    %355 = vmatprep.subr.mxu0 0.0
    %356 = vmatpush1.msra.mxu0 %v320
    %357 = vmatprep.subr.mxu0 0.0
    %358 = vmatpush1.msra.mxu0 %v321
    %359 = vmatprep.subr.mxu0 0.0
    %360 = vmatpush1.msra.mxu0 %v322
    %361 = vmatprep.subr.mxu0 0.0
    %362 = vmatpush1.msra.mxu0 %v323
    %363 = vmatprep.subr.mxu0 0.0
    %364 = vmatpush1.msra.mxu0 0.0
    %365 = vmatprep.subr.mxu0 0.0
    %366 = vmatpush1.msra.mxu0 0.0
    %367 = vmatprep.subr.mxu0 0.0
    %368 = vmatpush1.msra.mxu0 0.0
    %369 = vmatprep.subr.mxu0 0.0
    %370 = vmatpush1.msra.mxu0 0.0
    %371 = vmatprep.subr.mxu0 0.0
    %372 = vmatpush1.msra.mxu0 0.0
    %373 = vmatprep.subr.mxu0 0.0
    %374 = vmatpush1.msra.mxu0 0.0
    %375 = vmatprep.subr.mxu0 0.0
    %376 = vmatpush1.msra.mxu0 0.0
    %377 = vmatprep.subr.mxu0 0.0
    %378 = vmatpush1.msra.mxu0 0.0
    %379 = vmatprep.subr.mxu0 0.0
    %380 = vmatpush1.msra.mxu0 0.0
    %381 = vmatprep.subr.mxu0 0.0
    %382 = vmatpush1.msra.mxu0 0.0
    %383 = vmatprep.subr.mxu0 0.0
    %384 = vmatpush1.msra.mxu0 0.0
    %385 = vmatprep.subr.mxu0 0.0
    %386 = vmatpush1.msra.mxu0 0.0
    %387 = vmatprep.subr.mxu0 0.0
    %388 = vmatpush1.msra.mxu0 0.0
    %389 = vmatprep.subr.mxu0 0.0
    %390 = vmatpush1.msra.mxu0 0.0
    %391 = vmatprep.subr.mxu0 0.0
    %392 = vmatpush1.msra.mxu0 0.0
    %393 = vmatprep.subr.mxu0 0.0
    %394 = vmatpush1.msra.mxu0 0.0
    %395 = vmatprep.mubr.f32.mxu0 0.0
    %396 = vmatmul.mubr.f32.gmra.mrb[0].mxu0 %v307
    %v397 = vpop.f32.mrb[0].mxu0
    %v398 = vadd.f32 %v329, %v397
    %v399 = vpop.f32.mrb[0].mxu0
    %400 = vdwg.mxu0
    %v401 = vmax.f32 %v398, 0.0
    %v402 = vld [vmem:[#allocation10] sm:$0xff]
    %v403 = vld [vmem:[#allocation10 + $0x8] sm:$0xff]
    %v404 = vld [vmem:[#allocation10 + $0x10] sm:$0xff]
    %v405 = vld [vmem:[#allocation10 + $0x18] sm:$0xff]
    %v406 = vld [vmem:[#allocation10 + $0x20] sm:$0xff]
    %v407 = vld [vmem:[#allocation10 + $0x28] sm:$0xff]
    %v408 = vld [vmem:[#allocation10 + $0x30] sm:$0xff]
    %v409 = vld [vmem:[#allocation10 + $0x38] sm:$0xff]
    %v410 = vld [vmem:[#allocation10 + $0x40] sm:$0xff]
    %v411 = vld [vmem:[#allocation10 + $0x48] sm:$0xff]
    %v412 = vld [vmem:[#allocation10 + $0x50] sm:$0xff]
    %v413 = vld [vmem:[#allocation10 + $0x58] sm:$0xff]
    %v414 = vld [vmem:[#allocation10 + $0x60] sm:$0xff]
    %v415 = vld [vmem:[#allocation10 + $0x68] sm:$0xff]
    %v416 = vld [vmem:[#allocation10 + $0x70] sm:$0xff]
    %v417 = vld [vmem:[#allocation10 + $0x78] sm:$0xff]
    %v418 = vld [vmem:[%s8] sm:$0x1]
    %v420 = vlaneseq
    %v421 = vshrl.u32 %v420, 7
    %v422 = vsub.s32 0, %v421
    %v423 = vrot.slane %v418, %v422
    %425 = vmatprep.subr.mxu0 0.0
    %426 = vmatpush1.msra.mxu0 %v402
    %427 = vmatprep.subr.mxu0 0.0
    %428 = vmatpush1.msra.mxu0 %v403
    %429 = vmatprep.subr.mxu0 0.0
    %430 = vmatpush1.msra.mxu0 %v404
    %431 = vmatprep.subr.mxu0 0.0
    %432 = vmatpush1.msra.mxu0 %v405
    %433 = vmatprep.subr.mxu0 0.0
    %434 = vmatpush1.msra.mxu0 %v406
    %435 = vmatprep.subr.mxu0 0.0
    %436 = vmatpush1.msra.mxu0 %v407
    %437 = vmatprep.subr.mxu0 0.0
    %438 = vmatpush1.msra.mxu0 %v408
    %439 = vmatprep.subr.mxu0 0.0
    %440 = vmatpush1.msra.mxu0 %v409
    %441 = vmatprep.subr.mxu0 0.0
    %442 = vmatpush1.msra.mxu0 %v410
    %443 = vmatprep.subr.mxu0 0.0
    %444 = vmatpush1.msra.mxu0 %v411
    %445 = vmatprep.subr.mxu0 0.0
    %446 = vmatpush1.msra.mxu0 %v412
    %447 = vmatprep.subr.mxu0 0.0
    %448 = vmatpush1.msra.mxu0 %v413
    %449 = vmatprep.subr.mxu0 0.0
    %450 = vmatpush1.msra.mxu0 %v414
    %451 = vmatprep.subr.mxu0 0.0
    %452 = vmatpush1.msra.mxu0 %v415
    %453 = vmatprep.subr.mxu0 0.0
    %454 = vmatpush1.msra.mxu0 %v416
    %455 = vmatprep.subr.mxu0 0.0
    %456 = vmatpush1.msra.mxu0 %v417
    %457 = vmatprep.subr.mxu0 0.0
    %458 = vmatpush1.msra.mxu0 0.0
    %459 = vmatprep.subr.mxu0 0.0
    %460 = vmatpush1.msra.mxu0 0.0
    %461 = vmatprep.subr.mxu0 0.0
    %462 = vmatpush1.msra.mxu0 0.0
    %463 = vmatprep.subr.mxu0 0.0
    %464 = vmatpush1.msra.mxu0 0.0
    %465 = vmatprep.subr.mxu0 0.0
    %466 = vmatpush1.msra.mxu0 0.0
    %467 = vmatprep.subr.mxu0 0.0
    %468 = vmatpush1.msra.mxu0 0.0
    %469 = vmatprep.subr.mxu0 0.0
    %470 = vmatpush1.msra.mxu0 0.0
    %471 = vmatprep.subr.mxu0 0.0
    %472 = vmatpush1.msra.mxu0 0.0
    %473 = vmatprep.subr.mxu0 0.0
    %474 = vmatpush1.msra.mxu0 0.0
    %475 = vmatprep.subr.mxu0 0.0
    %476 = vmatpush1.msra.mxu0 0.0
    %477 = vmatprep.subr.mxu0 0.0
    %478 = vmatpush1.msra.mxu0 0.0
    %479 = vmatprep.subr.mxu0 0.0
    %480 = vmatpush1.msra.mxu0 0.0
    %481 = vmatprep.subr.mxu0 0.0
    %482 = vmatpush1.msra.mxu0 0.0
    %483 = vmatprep.subr.mxu0 0.0
    %484 = vmatpush1.msra.mxu0 0.0
    %485 = vmatprep.subr.mxu0 0.0
    %486 = vmatpush1.msra.mxu0 0.0
    %487 = vmatprep.subr.mxu0 0.0
    %488 = vmatpush1.msra.mxu0 0.0
    %489 = vmatprep.mubr.f32.mxu0 0.0
    %490 = vmatmul.mubr.f32.gmra.mrb[0].mxu0 %v401
    %v491 = vpop.f32.mrb[0].mxu0
    %v492 = vadd.f32 %v423, %v491
    %v493 = vpop.f32.mrb[0].mxu0
    %494 = vdwg.mxu0
    %v495 = vmax.f32 %v492, 0.0
    %v496 = vld [vmem:[#allocation11] sm:$0xff]
    %v497 = vld [vmem:[#allocation11 + $0x8] sm:$0xff]
    %v498 = vld [vmem:[#allocation11 + $0x10] sm:$0xff]
    %v499 = vld [vmem:[#allocation11 + $0x18] sm:$0xff]
    %v500 = vld [vmem:[#allocation11 + $0x20] sm:$0xff]
    %v501 = vld [vmem:[#allocation11 + $0x28] sm:$0xff]
    %v502 = vld [vmem:[#allocation11 + $0x30] sm:$0xff]
    %v503 = vld [vmem:[#allocation11 + $0x38] sm:$0xff]
    %v504 = vld [vmem:[#allocation11 + $0x40] sm:$0xff]
    %v505 = vld [vmem:[#allocation11 + $0x48] sm:$0xff]
    %v506 = vld [vmem:[#allocation11 + $0x50] sm:$0xff]
    %v507 = vld [vmem:[#allocation11 + $0x58] sm:$0xff]
    %v508 = vld [vmem:[#allocation11 + $0x60] sm:$0xff]
    %v509 = vld [vmem:[#allocation11 + $0x68] sm:$0xff]
    %v510 = vld [vmem:[#allocation11 + $0x70] sm:$0xff]
    %v511 = vld [vmem:[#allocation11 + $0x78] sm:$0xff]
    %v512 = vld [vmem:[%s10] sm:$0x1]
    %v514 = vlaneseq
    %v515 = vshrl.u32 %v514, 7
    %v516 = vsub.s32 0, %v515
    %v517 = vrot.slane %v512, %v516
    %519 = vmatprep.subr.mxu0 0.0
    %520 = vmatpush1.msra.mxu0 %v496
    %521 = vmatprep.subr.mxu0 0.0
    %522 = vmatpush1.msra.mxu0 %v497
    %523 = vmatprep.subr.mxu0 0.0
    %524 = vmatpush1.msra.mxu0 %v498
    %525 = vmatprep.subr.mxu0 0.0
    %526 = vmatpush1.msra.mxu0 %v499
    %527 = vmatprep.subr.mxu0 0.0
    %528 = vmatpush1.msra.mxu0 %v500
    %529 = vmatprep.subr.mxu0 0.0
    %530 = vmatpush1.msra.mxu0 %v501
    %531 = vmatprep.subr.mxu0 0.0
    %532 = vmatpush1.msra.mxu0 %v502
    %533 = vmatprep.subr.mxu0 0.0
    %534 = vmatpush1.msra.mxu0 %v503
    %535 = vmatprep.subr.mxu0 0.0
    %536 = vmatpush1.msra.mxu0 %v504
    %537 = vmatprep.subr.mxu0 0.0
    %538 = vmatpush1.msra.mxu0 %v505
    %539 = vmatprep.subr.mxu0 0.0
    %540 = vmatpush1.msra.mxu0 %v506
    %541 = vmatprep.subr.mxu0 0.0
    %542 = vmatpush1.msra.mxu0 %v507
    %543 = vmatprep.subr.mxu0 0.0
    %544 = vmatpush1.msra.mxu0 %v508
    %545 = vmatprep.subr.mxu0 0.0
    %546 = vmatpush1.msra.mxu0 %v509
    %547 = vmatprep.subr.mxu0 0.0
    %548 = vmatpush1.msra.mxu0 %v510
    %549 = vmatprep.subr.mxu0 0.0
    %550 = vmatpush1.msra.mxu0 %v511
    %551 = vmatprep.subr.mxu0 0.0
    %552 = vmatpush1.msra.mxu0 0.0
    %553 = vmatprep.subr.mxu0 0.0
    %554 = vmatpush1.msra.mxu0 0.0
    %555 = vmatprep.subr.mxu0 0.0
    %556 = vmatpush1.msra.mxu0 0.0
    %557 = vmatprep.subr.mxu0 0.0
    %558 = vmatpush1.msra.mxu0 0.0
    %559 = vmatprep.subr.mxu0 0.0
    %560 = vmatpush1.msra.mxu0 0.0
    %561 = vmatprep.subr.mxu0 0.0
    %562 = vmatpush1.msra.mxu0 0.0
    %563 = vmatprep.subr.mxu0 0.0
    %564 = vmatpush1.msra.mxu0 0.0
    %565 = vmatprep.subr.mxu0 0.0
    %566 = vmatpush1.msra.mxu0 0.0
    %567 = vmatprep.subr.mxu0 0.0
    %568 = vmatpush1.msra.mxu0 0.0
    %569 = vmatprep.subr.mxu0 0.0
    %570 = vmatpush1.msra.mxu0 0.0
    %571 = vmatprep.subr.mxu0 0.0
    %572 = vmatpush1.msra.mxu0 0.0
    %573 = vmatprep.subr.mxu0 0.0
    %574 = vmatpush1.msra.mxu0 0.0
    %575 = vmatprep.subr.mxu0 0.0
    %576 = vmatpush1.msra.mxu0 0.0
    %577 = vmatprep.subr.mxu0 0.0
    %578 = vmatpush1.msra.mxu0 0.0
    %579 = vmatprep.subr.mxu0 0.0
    %580 = vmatpush1.msra.mxu0 0.0
    %581 = vmatprep.subr.mxu0 0.0
    %582 = vmatpush1.msra.mxu0 0.0
    %583 = vmatprep.mubr.f32.mxu0 0.0
    %584 = vmatmul.mubr.f32.gmra.mrb[0].mxu0 %v495
    %v585 = vpop.f32.mrb[0].mxu0
    %v586 = vadd.f32 %v517, %v585
    %v587 = vpop.f32.mrb[0].mxu0
    %588 = vdwg.mxu0
    %589 = vst [vmem:[#allocation13] sm:$0xff] %v586
    // Predicated region
    $region70: #{tpu_custom_call.1} parent=1 // pred_check
      _
    $region71: #{tpu_custom_call.1} parent=1 // pred_check_branch
      %591 = sbr.rel (0) target = $region73
    $region72: #{tpu_custom_call.1} parent=1 // pred_region
      %s593 = ssub.s32 128, 128
      %594 = vsyncadd [#allocation4], %s593
      %s596 = sshll.u32 [#allocation13], 4
      %s597 = int_to_ptr.vmem [resolvable:$true] %s596
      %599 = dma.vmem_to_hbm [thread:$0]  %s597, 128, %s11, [#allocation4]
    $region73: #{tpu_custom_call.1} parent=1 // pred_fallthru
      _
    // Predicated region
    $region74: #{tpu_custom_call.1} parent=1 // pred_check
      _
    $region75: #{tpu_custom_call.1} parent=1 // pred_check_branch
      %601 = sbr.rel (0) target = $region77
    $region76: #{tpu_custom_call.1} parent=1 // pred_region
      %602 = dma.done [#allocation4], 128
    $region77: #{tpu_custom_call.1} parent=1 // pred_fallthru
      _
    %603 = vsyncpa [#allocation3], 1
    %604 = vsyncpa [#allocation6], 1
    %605 = vsyncpa [#allocation9], 1
    %606 = vsyncpa [#allocation12], 1
    %607 = vsyncpa [#allocation4], 1

</llo_original>
